<compile_context>
chip_gen: v7x
topology: tpu7x:2x2x1
jax: 0.10.0
libtpu: 0.0.40
codegen_flags: <defaults>
</compile_context>

<pallas_src>
import functools
import math

import jax
import jax.numpy as jnp
from jax.experimental import pallas as pl
from jax.experimental.pallas import tpu as pltpu

LOG_SIG_MAX = 2.0
LOG_SIG_MIN = -20.0


def _round_up(x, m):
    return ((x + m - 1) // m) * m


# ----------------------------------------------------------------------------
# Kernel
# ----------------------------------------------------------------------------
def _policy_kernel(x_ref, w1_ref, b1_ref, w2_ref, b2_ref, wh_ref, bh_ref,
                   out_ref, *, num_actions):
    # MXU operands in bf16, accumulate + elementwise in f32.
    x = x_ref[...].astype(jnp.bfloat16)

    h1 = jnp.dot(x, w1_ref[...], preferred_element_type=jnp.float32) + b1_ref[...]
    h1 = jnp.maximum(h1, 0.0).astype(jnp.bfloat16)

    h2 = jnp.dot(h1, w2_ref[...], preferred_element_type=jnp.float32) + b2_ref[...]
    h2 = jnp.maximum(h2, 0.0).astype(jnp.bfloat16)

    # Fused heads: columns [0, A) = mean, [A, 2A) = log_std, rest = zero pad.
    head = jnp.dot(h2, wh_ref[...], preferred_element_type=jnp.float32) + bh_ref[...]

    lane = jax.lax.broadcasted_iota(jnp.int32, head.shape, dimension=1)
    is_log_std = (lane >= num_actions) & (lane < 2 * num_actions)
    out_ref[...] = jnp.where(
        is_log_std, jnp.clip(head, LOG_SIG_MIN, LOG_SIG_MAX), head)


# ----------------------------------------------------------------------------
# Param packing (done once): bf16 weights, fused + lane-padded head.
# ----------------------------------------------------------------------------
def pack_params(params):
    """(w1,b1,w2,b2,wm,bm,ws,bs) f32 -> kernel-ready packed params."""
    w1, b1, w2, b2, wm, bm, ws, bs = params
    num_actions = wm.shape[1]
    head_dim = 2 * num_actions
    head_pad = max(128, _round_up(head_dim, 128))

    wh = jnp.concatenate([wm, ws], axis=1)
    bh = jnp.concatenate([bm, bs], axis=1)
    wh = jnp.pad(wh, ((0, 0), (0, head_pad - head_dim)))
    bh = jnp.pad(bh, ((0, 0), (0, head_pad - head_dim)))

    packed = (w1.astype(jnp.bfloat16), b1.astype(jnp.float32),
              w2.astype(jnp.bfloat16), b2.astype(jnp.float32),
              wh.astype(jnp.bfloat16), bh.astype(jnp.float32))
    return packed, num_actions


# ----------------------------------------------------------------------------
# Wrapper
# ----------------------------------------------------------------------------
def gaussian_policy_forward(state, packed, num_actions, *, block_b=512):
    """state: (B, num_inputs) f32. Returns (mean, log_std), each (B, num_actions) f32."""
    w1, b1, w2, b2, wh, bh = packed
    B, num_inputs = state.shape
    hidden = w1.shape[1]
    head_pad = wh.shape[1]

    # Batch tile: multiple of 8 (f32 sublanes); pad B so every tile is full.
    tb = min(block_b, _round_up(B, 8))
    b_pad = _round_up(B, tb)
    if b_pad != B:
        state = jnp.pad(state, ((0, b_pad - B), (0, 0)))
    grid = (b_pad // tb,)

    kernel = functools.partial(_policy_kernel, num_actions=num_actions)

    flops = 2 * b_pad * (num_inputs * hidden + hidden * hidden + hidden * head_pad)
    bytes_accessed = (b_pad * num_inputs * 4
                      + sum(int(p.size) * p.dtype.itemsize for p in packed)
                      + b_pad * head_pad * 4)

    out = pl.pallas_call(
        kernel,
        out_shape=jax.ShapeDtypeStruct((b_pad, head_pad), jnp.float32),
        grid=grid,
        in_specs=[
            pl.BlockSpec((tb, num_inputs), lambda i: (i, 0)),   # state: tiled on batch
            pl.BlockSpec(w1.shape, lambda i: (0, 0)),           # weights/bias: VMEM-resident
            pl.BlockSpec(b1.shape, lambda i: (0, 0)),
            pl.BlockSpec(w2.shape, lambda i: (0, 0)),
            pl.BlockSpec(b2.shape, lambda i: (0, 0)),
            pl.BlockSpec(wh.shape, lambda i: (0, 0)),
            pl.BlockSpec(bh.shape, lambda i: (0, 0)),
        ],
        out_specs=pl.BlockSpec((tb, head_pad), lambda i: (i, 0)),
        compiler_params=pltpu.CompilerParams(
            dimension_semantics=("parallel",)),
        cost_estimate=pl.CostEstimate(
            flops=flops, transcendentals=0, bytes_accessed=bytes_accessed),
    )(state, w1, b1, w2, b2, wh, bh)

    mean = out[:B, :num_actions]
    log_std = out[:B, num_actions:2 * num_actions]
    return mean, log_std


# ----------------------------------------------------------------------------
# Init (torch-equivalent: xavier_uniform_ on (out,in) weights, zero bias);
# weights stored transposed as (in, out) so the kernel does x @ W + b.
# ----------------------------------------------------------------------------
def xavier_uniform(key, fan_in, fan_out):
    limit = math.sqrt(6.0 / (fan_in + fan_out))
    return jax.random.uniform(key, (fan_in, fan_out), jnp.float32, -limit, limit)


def init_params(key, num_inputs, num_actions, hidden_dim):
    k1, k2, k3, k4 = jax.random.split(key, 4)
    w1 = xavier_uniform(k1, num_inputs, hidden_dim)
    b1 = jnp.zeros((1, hidden_dim), jnp.float32)
    w2 = xavier_uniform(k2, hidden_dim, hidden_dim)
    b2 = jnp.zeros((1, hidden_dim), jnp.float32)
    wm = xavier_uniform(k3, hidden_dim, num_actions)
    bm = jnp.zeros((1, num_actions), jnp.float32)
    ws = xavier_uniform(k4, hidden_dim, num_actions)
    bs = jnp.zeros((1, num_actions), jnp.float32)
    return (w1, b1, w2, b2, wm, bm, ws, bs)


def reference_forward(state, params):
    w1, b1, w2, b2, wm, bm, ws, bs = params
    h1 = jnp.maximum(state @ w1 + b1, 0.0)
    h2 = jnp.maximum(h1 @ w2 + b2, 0.0)
    mean = h2 @ wm + bm
    log_std = jnp.clip(h2 @ ws + bs, LOG_SIG_MIN, LOG_SIG_MAX)
    return mean, log_std


if __name__ == "__main__":
    num_inputs, num_actions, hidden_dim = 16, 8, 32
    batch = 2

    key = jax.random.PRNGKey(0)
    k_params, k_state = jax.random.split(key)
    params = init_params(k_params, num_inputs, num_actions, hidden_dim)
    state = jax.random.normal(k_state, (batch, num_inputs), jnp.float32)

    packed, n_act = pack_params(params)
    mean, log_std = gaussian_policy_forward(state, packed, n_act)
    mean = jax.block_until_ready(mean)
    log_std = jax.block_until_ready(log_std)

    ref_mean, ref_log_std = reference_forward(state, params)
    assert mean.shape == (batch, num_actions)
    assert log_std.shape == (batch, num_actions)
    # bf16 MXU operands vs f32 reference -> loose tolerances.
    assert jnp.allclose(mean, ref_mean, atol=5e-2, rtol=5e-2)
    assert jnp.allclose(log_std, ref_log_std, atol=5e-2, rtol=5e-2)
    assert jnp.all(log_std >= LOG_SIG_MIN) and jnp.all(log_std <= LOG_SIG_MAX)

    print("KERNEL_OK")
</pallas_src>

<mosaic_0001>
module attributes {stable_mosaic.version = 11 : i64} {
  func.func @_policy_kernel(%arg0: i32, %arg1: memref<8x16xf32, #tpu.memory_space<vmem>>, %arg2: memref<16x32xbf16, #tpu.memory_space<vmem>>, %arg3: memref<1x32xf32, #tpu.memory_space<vmem>>, %arg4: memref<32x32xbf16, #tpu.memory_space<vmem>>, %arg5: memref<1x32xf32, #tpu.memory_space<vmem>>, %arg6: memref<32x128xbf16, #tpu.memory_space<vmem>>, %arg7: memref<1x128xf32, #tpu.memory_space<vmem>>, %arg8: memref<8x128xf32, #tpu.memory_space<vmem>>) attributes {dimension_semantics = [#tpu.dimension_semantics<parallel>], iteration_bounds = array<i64: 1>, scalar_prefetch = 0 : i64, scratch_operands = 0 : i64, tpu.core_type = #tpu.core_type<tc>, window_params = [{transform_indices = @transform_0, window_bounds = array<i64: 8, 16>}, {pipeline_mode = #tpu.pipeline_mode<synchronous>, transform_indices = @transform_1, window_bounds = array<i64: 16, 32>}, {pipeline_mode = #tpu.pipeline_mode<synchronous>, transform_indices = @transform_2, window_bounds = array<i64: 1, 32>}, {pipeline_mode = #tpu.pipeline_mode<synchronous>, transform_indices = @transform_3, window_bounds = array<i64: 32, 32>}, {pipeline_mode = #tpu.pipeline_mode<synchronous>, transform_indices = @transform_4, window_bounds = array<i64: 1, 32>}, {pipeline_mode = #tpu.pipeline_mode<synchronous>, transform_indices = @transform_5, window_bounds = array<i64: 32, 128>}, {pipeline_mode = #tpu.pipeline_mode<synchronous>, transform_indices = @transform_6, window_bounds = array<i64: 1, 128>}, {transform_indices = @transform_7, window_bounds = array<i64: 8, 128>}]} {
    %c0 = arith.constant 0 : index
    %c0_0 = arith.constant 0 : index
    %0 = vector.load %arg1[%c0, %c0_0] : memref<8x16xf32, #tpu.memory_space<vmem>>, vector<8x16xf32>
    %1 = arith.truncf %0 : vector<8x16xf32> to vector<8x16xbf16>
    %c0_1 = arith.constant 0 : index
    %c0_2 = arith.constant 0 : index
    %2 = vector.load %arg2[%c0_1, %c0_2] : memref<16x32xbf16, #tpu.memory_space<vmem>>, vector<16x32xbf16>
    %cst = arith.constant dense<0.000000e+00> : vector<8x32xf32>
    %3 = tpu.matmul %1, %2, %cst {dimension_numbers = #tpu.dot_dimension_numbers<[1], [0], [0], [1], [0, 0, 1, 1], [], []>} : vector<8x16xbf16>, vector<16x32xbf16>, vector<8x32xf32> -> vector<8x32xf32>
    %c0_3 = arith.constant 0 : index
    %c0_4 = arith.constant 0 : index
    %4 = vector.load %arg3[%c0_3, %c0_4] : memref<1x32xf32, #tpu.memory_space<vmem>>, vector<1x32xf32>
    %5 = vector.broadcast %4 : vector<1x32xf32> to vector<8x32xf32>
    %6 = arith.addf %3, %5 : vector<8x32xf32>
    %cst_5 = arith.constant 0.000000e+00 : f32
    %7 = vector.broadcast %cst_5 : f32 to vector<8x32xf32>
    %8 = arith.maximumf %6, %7 : vector<8x32xf32>
    %9 = arith.truncf %8 : vector<8x32xf32> to vector<8x32xbf16>
    %c0_6 = arith.constant 0 : index
    %c0_7 = arith.constant 0 : index
    %10 = vector.load %arg4[%c0_6, %c0_7] : memref<32x32xbf16, #tpu.memory_space<vmem>>, vector<32x32xbf16>
    %cst_8 = arith.constant dense<0.000000e+00> : vector<8x32xf32>
    %11 = tpu.matmul %9, %10, %cst_8 {dimension_numbers = #tpu.dot_dimension_numbers<[1], [0], [0], [1], [0, 0, 1, 1], [], []>} : vector<8x32xbf16>, vector<32x32xbf16>, vector<8x32xf32> -> vector<8x32xf32>
    %c0_9 = arith.constant 0 : index
    %c0_10 = arith.constant 0 : index
    %12 = vector.load %arg5[%c0_9, %c0_10] : memref<1x32xf32, #tpu.memory_space<vmem>>, vector<1x32xf32>
    %13 = vector.broadcast %12 : vector<1x32xf32> to vector<8x32xf32>
    %14 = arith.addf %11, %13 : vector<8x32xf32>
    %cst_11 = arith.constant 0.000000e+00 : f32
    %15 = vector.broadcast %cst_11 : f32 to vector<8x32xf32>
    %16 = arith.maximumf %14, %15 : vector<8x32xf32>
    %17 = arith.truncf %16 : vector<8x32xf32> to vector<8x32xbf16>
    %c0_12 = arith.constant 0 : index
    %c0_13 = arith.constant 0 : index
    %18 = vector.load %arg6[%c0_12, %c0_13] : memref<32x128xbf16, #tpu.memory_space<vmem>>, vector<32x128xbf16>
    %cst_14 = arith.constant dense<0.000000e+00> : vector<8x128xf32>
    %19 = tpu.matmul %17, %18, %cst_14 {dimension_numbers = #tpu.dot_dimension_numbers<[1], [0], [0], [1], [0, 0, 1, 1], [], []>} : vector<8x32xbf16>, vector<32x128xbf16>, vector<8x128xf32> -> vector<8x128xf32>
    %c0_15 = arith.constant 0 : index
    %c0_16 = arith.constant 0 : index
    %20 = vector.load %arg7[%c0_15, %c0_16] : memref<1x128xf32, #tpu.memory_space<vmem>>, vector<1x128xf32>
    %21 = vector.broadcast %20 : vector<1x128xf32> to vector<8x128xf32>
    %22 = arith.addf %19, %21 : vector<8x128xf32>
    %23 = tpu.iota {dimensions = array<i32: 1>} : vector<8x128xi32>
    %c8_i32 = arith.constant 8 : i32
    %24 = vector.broadcast %c8_i32 : i32 to vector<8x128xi32>
    %25 = arith.cmpi sge, %23, %24 : vector<8x128xi32>
    %c16_i32 = arith.constant 16 : i32
    %26 = vector.broadcast %c16_i32 : i32 to vector<8x128xi32>
    %27 = arith.cmpi slt, %23, %26 : vector<8x128xi32>
    %28 = arith.andi %25, %27 : vector<8x128xi1>
    %cst_17 = arith.constant -2.000000e+01 : f32
    %cst_18 = arith.constant 2.000000e+00 : f32
    %29 = vector.broadcast %cst_17 : f32 to vector<8x128xf32>
    %30 = arith.maximumf %29, %22 : vector<8x128xf32>
    %31 = vector.broadcast %cst_18 : f32 to vector<8x128xf32>
    %32 = arith.minimumf %31, %30 : vector<8x128xf32>
    %33 = arith.select %28, %32, %22 : vector<8x128xi1>, vector<8x128xf32>
    %c0_19 = arith.constant 0 : index
    %c0_20 = arith.constant 0 : index
    %34 = vector.load %arg8[%c0_19, %c0_20] : memref<8x128xf32, #tpu.memory_space<vmem>>, vector<8x128xf32>
    tpu.vector_store %arg8[%c0_19, %c0_20], %33 {strides = array<i32>} : memref<8x128xf32, #tpu.memory_space<vmem>>, vector<8x128xf32>,
    return
  }
  func.func @transform_0(%arg0: i32) -> (i32, i32) {
    %c0_i32 = arith.constant 0 : i32
    %c0_i32_0 = arith.constant 0 : i32
    return %arg0, %c0_i32 : i32, i32
  }
  func.func @transform_1(%arg0: i32) -> (i32, i32) {
    %c0_i32 = arith.constant 0 : i32
    %c0_i32_0 = arith.constant 0 : i32
    %c0_i32_1 = arith.constant 0 : i32
    return %c0_i32, %c0_i32_0 : i32, i32
  }
  func.func @transform_2(%arg0: i32) -> (i32, i32) {
    %c0_i32 = arith.constant 0 : i32
    %c0_i32_0 = arith.constant 0 : i32
    %c0_i32_1 = arith.constant 0 : i32
    return %c0_i32, %c0_i32_0 : i32, i32
  }
  func.func @transform_3(%arg0: i32) -> (i32, i32) {
    %c0_i32 = arith.constant 0 : i32
    %c0_i32_0 = arith.constant 0 : i32
    %c0_i32_1 = arith.constant 0 : i32
    return %c0_i32, %c0_i32_0 : i32, i32
  }
  func.func @transform_4(%arg0: i32) -> (i32, i32) {
    %c0_i32 = arith.constant 0 : i32
    %c0_i32_0 = arith.constant 0 : i32
    %c0_i32_1 = arith.constant 0 : i32
    return %c0_i32, %c0_i32_0 : i32, i32
  }
  func.func @transform_5(%arg0: i32) -> (i32, i32) {
    %c0_i32 = arith.constant 0 : i32
    %c0_i32_0 = arith.constant 0 : i32
    %c0_i32_1 = arith.constant 0 : i32
    return %c0_i32, %c0_i32_0 : i32, i32
  }
  func.func @transform_6(%arg0: i32) -> (i32, i32) {
    %c0_i32 = arith.constant 0 : i32
    %c0_i32_0 = arith.constant 0 : i32
    %c0_i32_1 = arith.constant 0 : i32
    return %c0_i32, %c0_i32_0 : i32, i32
  }
  func.func @transform_7(%arg0: i32) -> (i32, i32) {
    %c0_i32 = arith.constant 0 : i32
    %c0_i32_0 = arith.constant 0 : i32
    return %arg0, %c0_i32 : i32, i32
  }
}

</mosaic_0001>

<llo_original>
// kernel: tpu_custom_call.1
$region0: #{tpu_custom_call.1}
  #allocation0 [shape = 'u32[]', space=smem, size = 0x4, offset = 0x4, fixed_abs, tag = 'smem constant byte address 0x4 - core index']
  #allocation1 [shape = 'u32[144,128]{1,0:T(1,128)}', space=vmem, size = 0x12000, scoped, tag = 'internal scratch']
  %s0 = inlined_call_operand.hbm [shape: f32[8,16], index: 0, kind: input, shape index: {}]
  %s1 = inlined_call_operand.hbm [shape: bf16[16,32], index: 1, kind: input, shape index: {}]
  %s2 = inlined_call_operand.vmem [shape: f32[1,32], index: 2, kind: input, shape index: {}]
  %s3 = inlined_call_operand.hbm [shape: bf16[32,32], index: 3, kind: input, shape index: {}]
  %s4 = inlined_call_operand.vmem [shape: f32[1,32], index: 4, kind: input, shape index: {}]
  %s5 = inlined_call_operand.vmem [shape: bf16[32,128], index: 5, kind: input, shape index: {}]
  %s6 = inlined_call_operand.vmem [shape: f32[1,128], index: 6, kind: input, shape index: {}]
  %s7 = inlined_call_operand.hbm [shape: f32[8,128], index: 7, kind: output, shape index: {}]
  %s8 = sld [smem:[#allocation0]]
  $region50: #{tpu_custom_call.1} parent=0
    _
  %s10 = ssub.s32 1, %s8
  %s11 = scalar_select 0, %s10, %s8
  $region1: #{tpu_custom_call.1} parent=0
    #allocation2 [shape = 'u8[4096]{0}', space=vmem, size = 0x1000, scoped, tag = 'input window, operand 0, single buffered']
    #allocation3 [shape = 's32[1]{0}', space=sflag, size = 0x4, scoped, tag = 'scoped memory for tpu_custom_call.1']
    #allocation4 [shape = 's32[1]{0}', space=sflag, size = 0x4, scoped, tag = 'scoped memory for tpu_custom_call.1']
    #allocation5 [shape = 'u8[4096]{0}', space=vmem, size = 0x1000, scoped, tag = 'input window, operand 1, single buffered']
    #allocation6 [shape = 's32[1]{0}', space=sflag, size = 0x4, scoped, tag = 'scoped memory for tpu_custom_call.1']
    #allocation7 [shape = 'u8[8192]{0}', space=vmem, size = 0x2000, scoped, tag = 'input window, operand 3, single buffered']
    #allocation8 [shape = 'u8[4096]{0}', space=vmem, size = 0x1000, scoped, tag = 'output window, operand 0, single buffered']
    %12 = vsyncpa [#allocation3], 0
    %13 = vsyncpa [#allocation6], 0
    %14 = vsyncpa [#allocation4], 0
    // Predicated region
    $region2: #{tpu_custom_call.1} parent=1 // pred_check
      _
    $region3: #{tpu_custom_call.1} parent=1 // pred_check_branch
      %16 = sbr.rel (0) target = $region5
    $region4: #{tpu_custom_call.1} parent=1 // pred_region
      %s18 = ssub.s32 128, 128
      %19 = vsyncadd [#allocation3], %s18
      %s21 = sshll.u32 [#allocation2], 4
      %s22 = int_to_ptr.vmem [resolvable:$true] %s21
      %24 = dma.hbm_to_vmem [thread:$0]  %s0, 128, %s22, [#allocation3]
    $region5: #{tpu_custom_call.1} parent=1 // pred_fallthru
      _
    // Predicated region
    $region6: #{tpu_custom_call.1} parent=1 // pred_check
      _
    $region7: #{tpu_custom_call.1} parent=1 // pred_check_branch
      %26 = sbr.rel (0) target = $region9
    $region8: #{tpu_custom_call.1} parent=1 // pred_region
      %s28 = ssub.s32 128, 128
      %29 = vsyncadd [#allocation6], %s28
      %s30 = sshll.u32 [#allocation5], 4
      %s31 = int_to_ptr.vmem [resolvable:$true] %s30
      %36 = dma.hbm_to_vmem [thread:$0]  %s1, 128, %s31, [#allocation6], 64, 64, 4
    $region9: #{tpu_custom_call.1} parent=1 // pred_fallthru
      _
    // Predicated region
    $region10: #{tpu_custom_call.1} parent=1 // pred_check
      _
    $region11: #{tpu_custom_call.1} parent=1 // pred_check_branch
      %38 = sbr.rel (0) target = $region13
    $region12: #{tpu_custom_call.1} parent=1 // pred_region
      _
    $region13: #{tpu_custom_call.1} parent=1 // pred_fallthru
      _
    // Predicated region
    $region14: #{tpu_custom_call.1} parent=1 // pred_check
      _
    $region15: #{tpu_custom_call.1} parent=1 // pred_check_branch
      %40 = sbr.rel (0) target = $region17
    $region16: #{tpu_custom_call.1} parent=1 // pred_region
      %s42 = ssub.s32 256, 256
      %43 = vsyncadd [#allocation6], %s42
      %s44 = sshll.u32 [#allocation7], 4
      %s45 = int_to_ptr.vmem [resolvable:$true] %s44
      %50 = dma.hbm_to_vmem [thread:$0]  %s3, 256, %s45, [#allocation6], 64, 64, 4
    $region17: #{tpu_custom_call.1} parent=1 // pred_fallthru
      _
    // Predicated region
    $region18: #{tpu_custom_call.1} parent=1 // pred_check
      _
    $region19: #{tpu_custom_call.1} parent=1 // pred_check_branch
      %52 = sbr.rel (0) target = $region21
    $region20: #{tpu_custom_call.1} parent=1 // pred_region
      _
    $region21: #{tpu_custom_call.1} parent=1 // pred_fallthru
      _
    // Predicated region
    $region22: #{tpu_custom_call.1} parent=1 // pred_check
      _
    $region23: #{tpu_custom_call.1} parent=1 // pred_check_branch
      %54 = sbr.rel (0) target = $region25
    $region24: #{tpu_custom_call.1} parent=1 // pred_region
      _
    $region25: #{tpu_custom_call.1} parent=1 // pred_fallthru
      _
    // Predicated region
    $region26: #{tpu_custom_call.1} parent=1 // pred_check
      _
    $region27: #{tpu_custom_call.1} parent=1 // pred_check_branch
      %56 = sbr.rel (0) target = $region29
    $region28: #{tpu_custom_call.1} parent=1 // pred_region
      _
    $region29: #{tpu_custom_call.1} parent=1 // pred_fallthru
      _
    // Predicated region
    $region30: #{tpu_custom_call.1} parent=1 // pred_check
      _
    $region31: #{tpu_custom_call.1} parent=1 // pred_check_branch
      %58 = sbr.rel (0) target = $region33
    $region32: #{tpu_custom_call.1} parent=1 // pred_region
      %59 = dma.done [#allocation3], 128
    $region33: #{tpu_custom_call.1} parent=1 // pred_fallthru
      _
    // Predicated region
    $region34: #{tpu_custom_call.1} parent=1 // pred_check
      _
    $region35: #{tpu_custom_call.1} parent=1 // pred_check_branch
      %61 = sbr.rel (0) target = $region37
    $region36: #{tpu_custom_call.1} parent=1 // pred_region
      %62 = dma.done [#allocation6], 128
    $region37: #{tpu_custom_call.1} parent=1 // pred_fallthru
      _
    // Predicated region
    $region38: #{tpu_custom_call.1} parent=1 // pred_check
      _
    $region39: #{tpu_custom_call.1} parent=1 // pred_check_branch
      %64 = sbr.rel (0) target = $region41
    $region40: #{tpu_custom_call.1} parent=1 // pred_region
      %65 = dma.done [#allocation6], 256
    $region41: #{tpu_custom_call.1} parent=1 // pred_fallthru
      _
    %v67 = vld [vmem:[#allocation2] sm:$0xff]
    %v68 = vpack.c.bf16 %v67, %v67
    %v69 = vld [vmem:[#allocation5] sm:$0xf]
    %v70 = vld [vmem:[#allocation5 + $0x4] sm:$0xf]
    %v71 = vld [vmem:[%s2] sm:$0x1]
    %v73 = vlaneseq
    %v74 = vshrl.u32 %v73, 7
    %v75 = vsub.s32 0, %v74
    %v76 = vrot.slane %v71, %v75
    %v80 = vunpack.c.l.b16 %v69
    %v81 = vunpack.c.l.b16 %v70
    %v82 = vpack.c.b16 %v81, %v80
    %vm84 = vcmask 130048
    %v86 = vsel %vm84, %v68, 0
    %88 = vmatprep.subr.bf16.mxu0 0
    %89 = vmatpush1.bf16.msra.mxu0 %v82
    %90 = vmatprep.subr.bf16.mxu0 0
    %91 = vmatpush1.bf16.msra.mxu0 0
    %92 = vmatprep.subr.bf16.mxu0 0
    %93 = vmatpush1.bf16.msra.mxu0 0
    %94 = vmatprep.subr.bf16.mxu0 0
    %95 = vmatpush1.bf16.msra.mxu0 0
    %96 = vmatprep.subr.bf16.mxu0 0
    %97 = vmatpush1.bf16.msra.mxu0 0
    %98 = vmatprep.subr.bf16.mxu0 0
    %99 = vmatpush1.bf16.msra.mxu0 0
    %100 = vmatprep.subr.bf16.mxu0 0
    %101 = vmatpush1.bf16.msra.mxu0 0
    %102 = vmatprep.subr.bf16.mxu0 0
    %103 = vmatpush1.bf16.msra.mxu0 0
    %104 = vmatprep.subr.bf16.mxu0 0
    %105 = vmatpush1.bf16.msra.mxu0 0
    %106 = vmatprep.subr.bf16.mxu0 0
    %107 = vmatpush1.bf16.msra.mxu0 0
    %108 = vmatprep.subr.bf16.mxu0 0
    %109 = vmatpush1.bf16.msra.mxu0 0
    %110 = vmatprep.subr.bf16.mxu0 0
    %111 = vmatpush1.bf16.msra.mxu0 0
    %112 = vmatprep.subr.bf16.mxu0 0
    %113 = vmatpush1.bf16.msra.mxu0 0
    %114 = vmatprep.subr.bf16.mxu0 0
    %115 = vmatpush1.bf16.msra.mxu0 0
    %116 = vmatprep.subr.bf16.mxu0 0
    %117 = vmatpush1.bf16.msra.mxu0 0
    %118 = vmatprep.subr.bf16.mxu0 0
    %119 = vmatpush1.bf16.msra.mxu0 0
    %120 = vmatprep.mubr.bf16.mxu0 0
    %121 = vmatmul.mubr.bf16.gmra.mrb[0].mxu0 %v86
    %v122 = vpop.f32.mrb[0].mxu0
    %v123 = vadd.f32 %v76, %v122
    %v124 = vpop.f32.mrb[0].mxu0
    %v125 = vpop.f32.mrb[0].mxu0
    %v126 = vpop.f32.mrb[0].mxu0
    %127 = vdwg.mxu0
    %v128 = vmax.f32 %v123, 0.0
    %v129 = vpack.c.bf16 %v128, %v128
    %v130 = vld [vmem:[#allocation7] sm:$0xf]
    %v131 = vld [vmem:[#allocation7 + $0x4] sm:$0xf]
    %v132 = vld [vmem:[#allocation7 + $0x8] sm:$0xf]
    %v133 = vld [vmem:[#allocation7 + $0xc] sm:$0xf]
    %v134 = vld [vmem:[%s4] sm:$0x1]
    %v136 = vlaneseq
    %v137 = vshrl.u32 %v136, 7
    %v138 = vsub.s32 0, %v137
    %v139 = vrot.slane %v134, %v138
    %v145 = vunpack.c.l.b16 %v130
    %v146 = vunpack.c.l.b16 %v131
    %v147 = vunpack.c.l.b16 %v132
    %v148 = vunpack.c.l.b16 %v133
    %v149 = vpack.c.b16 %v146, %v145
    %v150 = vpack.c.b16 %v148, %v147
    %vm153 = vcmask 261120
    %v155 = vsel %vm153, %v129, 0
    %157 = vmatprep.subr.bf16.mxu0 0
    %158 = vmatpush1.bf16.msra.mxu0 %v149
    %159 = vmatprep.subr.bf16.mxu0 0
    %160 = vmatpush1.bf16.msra.mxu0 %v150
    %161 = vmatprep.subr.bf16.mxu0 0
    %162 = vmatpush1.bf16.msra.mxu0 0
    %163 = vmatprep.subr.bf16.mxu0 0
    %164 = vmatpush1.bf16.msra.mxu0 0
    %165 = vmatprep.subr.bf16.mxu0 0
    %166 = vmatpush1.bf16.msra.mxu0 0
    %167 = vmatprep.subr.bf16.mxu0 0
    %168 = vmatpush1.bf16.msra.mxu0 0
    %169 = vmatprep.subr.bf16.mxu0 0
    %170 = vmatpush1.bf16.msra.mxu0 0
    %171 = vmatprep.subr.bf16.mxu0 0
    %172 = vmatpush1.bf16.msra.mxu0 0
    %173 = vmatprep.subr.bf16.mxu0 0
    %174 = vmatpush1.bf16.msra.mxu0 0
    %175 = vmatprep.subr.bf16.mxu0 0
    %176 = vmatpush1.bf16.msra.mxu0 0
    %177 = vmatprep.subr.bf16.mxu0 0
    %178 = vmatpush1.bf16.msra.mxu0 0
    %179 = vmatprep.subr.bf16.mxu0 0
    %180 = vmatpush1.bf16.msra.mxu0 0
    %181 = vmatprep.subr.bf16.mxu0 0
    %182 = vmatpush1.bf16.msra.mxu0 0
    %183 = vmatprep.subr.bf16.mxu0 0
    %184 = vmatpush1.bf16.msra.mxu0 0
    %185 = vmatprep.subr.bf16.mxu0 0
    %186 = vmatpush1.bf16.msra.mxu0 0
    %187 = vmatprep.subr.bf16.mxu0 0
    %188 = vmatpush1.bf16.msra.mxu0 0
    %189 = vmatprep.mubr.bf16.mxu0 0
    %190 = vmatmul.mubr.bf16.gmra.mrb[0].mxu0 %v155
    %v191 = vpop.f32.mrb[0].mxu0
    %v192 = vadd.f32 %v139, %v191
    %v193 = vpop.f32.mrb[0].mxu0
    %v194 = vpop.f32.mrb[0].mxu0
    %v195 = vpop.f32.mrb[0].mxu0
    %196 = vdwg.mxu0
    %v197 = vmax.f32 %v192, 0.0
    %v198 = vpack.c.bf16 %v197, %v197
    %v199 = vld [vmem:[%s5] sm:$0xf]
    %v200 = vld [vmem:[%s5 + $0x4] sm:$0xf]
    %v201 = vld [vmem:[%s5 + $0x8] sm:$0xf]
    %v202 = vld [vmem:[%s5 + $0xc] sm:$0xf]
    %v203 = vld [vmem:[%s6] sm:$0x1]
    %v205 = vlaneseq
    %v206 = vshrl.u32 %v205, 7
    %v207 = vsub.s32 0, %v206
    %v208 = vrot.slane %v203, %v207
    %v214 = vunpack.c.l.b16 %v199
    %v215 = vunpack.c.l.b16 %v200
    %v216 = vunpack.c.l.b16 %v201
    %v217 = vunpack.c.l.b16 %v202
    %v218 = vpack.c.b16 %v215, %v214
    %v219 = vpack.c.b16 %v217, %v216
    %v223 = vsel %vm153, %v198, 0
    %225 = vmatprep.subr.bf16.mxu0 0
    %226 = vmatpush1.bf16.msra.mxu0 %v218
    %227 = vmatprep.subr.bf16.mxu0 0
    %228 = vmatpush1.bf16.msra.mxu0 %v219
    %229 = vmatprep.subr.bf16.mxu0 0
    %230 = vmatpush1.bf16.msra.mxu0 0
    %231 = vmatprep.subr.bf16.mxu0 0
    %232 = vmatpush1.bf16.msra.mxu0 0
    %233 = vmatprep.subr.bf16.mxu0 0
    %234 = vmatpush1.bf16.msra.mxu0 0
    %235 = vmatprep.subr.bf16.mxu0 0
    %236 = vmatpush1.bf16.msra.mxu0 0
    %237 = vmatprep.subr.bf16.mxu0 0
    %238 = vmatpush1.bf16.msra.mxu0 0
    %239 = vmatprep.subr.bf16.mxu0 0
    %240 = vmatpush1.bf16.msra.mxu0 0
    %241 = vmatprep.subr.bf16.mxu0 0
    %242 = vmatpush1.bf16.msra.mxu0 0
    %243 = vmatprep.subr.bf16.mxu0 0
    %244 = vmatpush1.bf16.msra.mxu0 0
    %245 = vmatprep.subr.bf16.mxu0 0
    %246 = vmatpush1.bf16.msra.mxu0 0
    %247 = vmatprep.subr.bf16.mxu0 0
    %248 = vmatpush1.bf16.msra.mxu0 0
    %249 = vmatprep.subr.bf16.mxu0 0
    %250 = vmatpush1.bf16.msra.mxu0 0
    %251 = vmatprep.subr.bf16.mxu0 0
    %252 = vmatpush1.bf16.msra.mxu0 0
    %253 = vmatprep.subr.bf16.mxu0 0
    %254 = vmatpush1.bf16.msra.mxu0 0
    %255 = vmatprep.subr.bf16.mxu0 0
    %256 = vmatpush1.bf16.msra.mxu0 0
    %257 = vmatprep.mubr.bf16.mxu0 0
    %258 = vmatmul.mubr.bf16.gmra.mrb[0].mxu0 %v223
    %v259 = vpop.f32.mrb[0].mxu0
    %v260 = vadd.f32 %v208, %v259
    %v261 = vpop.f32.mrb[0].mxu0
    %v262 = vpop.f32.mrb[0].mxu0
    %v263 = vpop.f32.mrb[0].mxu0
    %264 = vdwg.mxu0
    %v265 = vlaneseq
    %v266 = vand.u32 %v265, 127
    %vm267 = vcmp.ge.s32.totalorder %v266, 8
    %vm268 = vcmp.lt.s32.totalorder %v266, 16
    %vm269 = vmand %vm267, %vm268
    %v270 = vmax.f32 %v260, -20.0
    %v271 = vmin.f32 %v270, 2.0
    %v272 = vsel %vm269, %v271, %v260
    %273 = vst [vmem:[#allocation8] sm:$0xff] %v272
    // Predicated region
    $region42: #{tpu_custom_call.1} parent=1 // pred_check
      _
    $region43: #{tpu_custom_call.1} parent=1 // pred_check_branch
      %275 = sbr.rel (0) target = $region45
    $region44: #{tpu_custom_call.1} parent=1 // pred_region
      %s277 = ssub.s32 128, 128
      %278 = vsyncadd [#allocation4], %s277
      %s280 = sshll.u32 [#allocation8], 4
      %s281 = int_to_ptr.vmem [resolvable:$true] %s280
      %283 = dma.vmem_to_hbm [thread:$0]  %s281, 128, %s7, [#allocation4]
    $region45: #{tpu_custom_call.1} parent=1 // pred_fallthru
      _
    // Predicated region
    $region46: #{tpu_custom_call.1} parent=1 // pred_check
      _
    $region47: #{tpu_custom_call.1} parent=1 // pred_check_branch
      %285 = sbr.rel (0) target = $region49
    $region48: #{tpu_custom_call.1} parent=1 // pred_region
      %286 = dma.done [#allocation4], 128
    $region49: #{tpu_custom_call.1} parent=1 // pred_fallthru
      _
    %287 = vsyncpa [#allocation3], 1
    %288 = vsyncpa [#allocation6], 1
    %289 = vsyncpa [#allocation4], 1

</llo_original>
